<compile_context>
chip_gen: v6e
topology: v6e:2x2x1
jax: 0.10.0
libtpu: 0.0.40
codegen_flags: <defaults>
</compile_context>

<pallas_src>
import functools
import math

import jax
import jax.numpy as jnp
from jax.experimental import pallas as pl
from jax.experimental.pallas import tpu as pltpu


# ----------------------------------------------------------------------------
# In-kernel helpers (f32 elementwise math, bf16 MXU operands)
# ----------------------------------------------------------------------------
def _layer_norm(x, gamma, beta, eps=1e-5):
    mu = jnp.mean(x, axis=-1, keepdims=True)
    var = jnp.mean((x - mu) ** 2, axis=-1, keepdims=True)
    return (x - mu) * jax.lax.rsqrt(var + eps) * gamma + beta


def _bf16_matmul(a, b_ref):
    # a: f32 activations, b_ref: bf16 weight ref. MXU bf16, f32 accumulate.
    return jnp.dot(a.astype(jnp.bfloat16), b_ref[...],
                   preferred_element_type=jnp.float32)


def _gct_core(x, attn,
              wv_ref, bv_ref, wo_ref, bo_ref, g1_ref, be1_ref,
              w1_ref, b1_ref, w2_ref, b2_ref, g2_ref, be2_ref):
    """V projection, context, output proj, residual+LN, FFN, residual+LN."""
    v = _bf16_matmul(x, wv_ref) + bv_ref[...]
    ctx = jnp.dot(attn.astype(jnp.bfloat16), v.astype(jnp.bfloat16),
                  preferred_element_type=jnp.float32)
    o = _bf16_matmul(ctx, wo_ref) + bo_ref[...]

    h = _layer_norm(x + o, g1_ref[...], be1_ref[...])

    f = _bf16_matmul(h, w1_ref) + b1_ref[...]
    f = jnp.maximum(f, 0.0)
    f = _bf16_matmul(f, w2_ref) + b2_ref[...]

    return _layer_norm(h + f, g2_ref[...], be2_ref[...])


# ----------------------------------------------------------------------------
# Pallas kernels
# ----------------------------------------------------------------------------
def gct_prior_layer_kernel(x_ref, prior_ref,
                           wv_ref, bv_ref, wo_ref, bo_ref, g1_ref, be1_ref,
                           w1_ref, b1_ref, w2_ref, b2_ref, g2_ref, be2_ref,
                           out_x_ref):
    """Layer 0: attention := prior.  No Q/K/score/mask work is emitted."""
    x = x_ref[...]            # (T, D) f32
    attn = prior_ref[...]     # (T, T) f32
    y = _gct_core(x, attn,
                  wv_ref, bv_ref, wo_ref, bo_ref, g1_ref, be1_ref,
                  w1_ref, b1_ref, w2_ref, b2_ref, g2_ref, be2_ref)
    out_x_ref[...] = y.astype(out_x_ref.dtype)


def gct_attn_layer_kernel(x_ref, pad_ref, causal_ref, prev_attn_ref,
                          wq_ref, bq_ref, wk_ref, bk_ref,
                          wv_ref, bv_ref, wo_ref, bo_ref, g1_ref, be1_ref,
                          w1_ref, b1_ref, w2_ref, b2_ref, g2_ref, be2_ref,
                          out_x_ref, *rest, emit_attn):
    """Layers >= 1: masked softmax attention + fused KL(prev_attn || attn)."""
    if emit_attn:
        out_attn_ref, out_kl_ref = rest
    else:
        (out_kl_ref,) = rest

    x = x_ref[...]                               # (T, D) f32
    d_model = x.shape[-1]

    q = _bf16_matmul(x, wq_ref) + bq_ref[...]    # (T, D) f32
    k = _bf16_matmul(x, wk_ref) + bk_ref[...]    # (T, D) f32

    scale = 1.0 / math.sqrt(d_model)
    # q @ k.T on the MXU without materializing a transpose.
    scores = jax.lax.dot_general(
        q.astype(jnp.bfloat16), k.astype(jnp.bfloat16),
        dimension_numbers=(((1,), (1,)), ((), ())),
        preferred_element_type=jnp.float32) * scale          # (T, T)

    mask = causal_ref[...] * pad_ref[...]        # (T,T) * (1,T) -> (T,T)
    scores = scores + (1.0 - mask) * (-1e9)

    m = jnp.max(scores, axis=-1, keepdims=True)
    e = jnp.exp(scores - m)
    attn = e * pl.reciprocal(jnp.sum(e, axis=-1, keepdims=True), approx=False)

    y = _gct_core(x, attn,
                  wv_ref, bv_ref, wo_ref, bo_ref, g1_ref, be1_ref,
                  w1_ref, b1_ref, w2_ref, b2_ref, g2_ref, be2_ref)
    out_x_ref[...] = y.astype(out_x_ref.dtype)

    # Fused KL(prev_attn || attn) partial sum for this batch element.
    p = prev_attn_ref[...]
    log_p = jnp.log(jnp.maximum(p, 1e-12))
    log_q = jnp.log(jnp.maximum(attn, 1e-12))
    out_kl_ref[...] = jnp.sum(p * (log_p - log_q), keepdims=True)  # (1, 1)

    if emit_attn:
        out_attn_ref[...] = attn.astype(out_attn_ref.dtype)


def readout_kernel(x_ref, out_ref):
    out_ref[...] = jnp.mean(x_ref[...], axis=0, keepdims=True)     # (1, D)


# ----------------------------------------------------------------------------
# Wrappers
# ----------------------------------------------------------------------------
_PARALLEL_B = pltpu.CompilerParams(dimension_semantics=("parallel",))


def _bf16(a):
    return a.astype(jnp.bfloat16)


def gct_prior_layer(x, prior, params):
    B, T, D = x.shape
    F = params["w1"].shape[1]
    ws = lambda m, n: pl.BlockSpec((m, n), lambda b: (0, 0))
    bs = lambda n: pl.BlockSpec((1, n), lambda b: (0, 0))

    in_specs = [
        pl.BlockSpec((None, T, D), lambda b: (b, 0, 0)),   # x (batch squeezed)
        pl.BlockSpec((None, T, T), lambda b: (b, 0, 0)),   # prior
        ws(D, D), bs(D),                                   # wv, bv
        ws(D, D), bs(D),                                   # wo, bo
        bs(D), bs(D),                                      # ln1 gamma, beta
        ws(D, F), bs(F),                                   # w1, b1
        ws(F, D), bs(D),                                   # w2, b2
        bs(D), bs(D),                                      # ln2 gamma, beta
    ]
    out_x = pl.pallas_call(
        gct_prior_layer_kernel,
        out_shape=jax.ShapeDtypeStruct((B, T, D), jnp.float32),
        grid=(B,),
        in_specs=in_specs,
        out_specs=pl.BlockSpec((None, T, D), lambda b: (b, 0, 0)),
        compiler_params=_PARALLEL_B,
    )(
        x, prior,
        _bf16(params["wv"]), params["bv"], _bf16(params["wo"]), params["bo"],
        params["g1"], params["be1"],
        _bf16(params["w1"]), params["b1"], _bf16(params["w2"]), params["b2"],
        params["g2"], params["be2"],
    )
    return out_x


def gct_attn_layer(x, pad, causal, prev_attn, params, *, emit_attn):
    B, T, D = x.shape
    F = params["w1"].shape[1]
    ws = lambda m, n: pl.BlockSpec((m, n), lambda b: (0, 0))
    bs = lambda n: pl.BlockSpec((1, n), lambda b: (0, 0))

    in_specs = [
        pl.BlockSpec((None, T, D), lambda b: (b, 0, 0)),   # x
        pl.BlockSpec((None, 1, T), lambda b: (b, 0, 0)),   # pad mask
        pl.BlockSpec((T, T), lambda b: (0, 0)),            # causal mask (shared)
        pl.BlockSpec((None, T, T), lambda b: (b, 0, 0)),   # previous attention
        ws(D, D), bs(D),                                   # wq, bq
        ws(D, D), bs(D),                                   # wk, bk
        ws(D, D), bs(D),                                   # wv, bv
        ws(D, D), bs(D),                                   # wo, bo
        bs(D), bs(D),                                      # ln1 gamma, beta
        ws(D, F), bs(F),                                   # w1, b1
        ws(F, D), bs(D),                                   # w2, b2
        bs(D), bs(D),                                      # ln2 gamma, beta
    ]

    out_shape = [jax.ShapeDtypeStruct((B, T, D), jnp.float32)]
    out_specs = [pl.BlockSpec((None, T, D), lambda b: (b, 0, 0))]
    if emit_attn:
        out_shape.append(jax.ShapeDtypeStruct((B, T, T), jnp.float32))
        out_specs.append(pl.BlockSpec((None, T, T), lambda b: (b, 0, 0)))
    out_shape.append(jax.ShapeDtypeStruct((B, 1, 1), jnp.float32))     # KL partials
    out_specs.append(pl.BlockSpec((None, 1, 1), lambda b: (b, 0, 0)))

    kernel = functools.partial(gct_attn_layer_kernel, emit_attn=emit_attn)
    outs = pl.pallas_call(
        kernel,
        out_shape=tuple(out_shape),
        grid=(B,),
        in_specs=in_specs,
        out_specs=tuple(out_specs),
        compiler_params=_PARALLEL_B,
    )(
        x, pad, causal, prev_attn,
        _bf16(params["wq"]), params["bq"], _bf16(params["wk"]), params["bk"],
        _bf16(params["wv"]), params["bv"], _bf16(params["wo"]), params["bo"],
        params["g1"], params["be1"],
        _bf16(params["w1"]), params["b1"], _bf16(params["w2"]), params["b2"],
        params["g2"], params["be2"],
    )
    if emit_attn:
        out_x, attn, kl = outs
        return out_x, attn, kl
    out_x, kl = outs
    return out_x, None, kl


def readout_mean(x):
    B, T, D = x.shape
    out = pl.pallas_call(
        readout_kernel,
        out_shape=jax.ShapeDtypeStruct((B, 1, D), jnp.float32),
        grid=(B,),
        in_specs=[pl.BlockSpec((None, T, D), lambda b: (b, 0, 0))],
        out_specs=pl.BlockSpec((None, 1, D), lambda b: (b, 0, 0)),
        compiler_params=_PARALLEL_B,
    )(x)
    return out[:, 0, :]


def gct_forward(seq_emds, pad_masks, causal_masks, priors, layer_params):
    B, T, _ = seq_emds.shape
    L = len(layer_params)

    x = seq_emds
    kl_sums = []
    prev_attn = priors
    for i, params in enumerate(layer_params):
        if i == 0:
            # attn_0 == prior exactly  =>  KL(prior || attn_0) == 0 exactly.
            x = gct_prior_layer(x, priors, params)
            prev_attn = priors
        else:
            emit_attn = i < (L - 1)   # the last layer's attention is never read
            x, attn, kl = gct_attn_layer(x, pad_masks, causal_masks, prev_attn,
                                         params, emit_attn=emit_attn)
            kl_sums.append(kl)
            if emit_attn:
                prev_attn = attn

    kl_terms = [jnp.zeros((), jnp.float32)]                       # layer-0 term
    kl_terms += [jnp.sum(s) / jnp.float32(B * T) for s in kl_sums]
    kld_loss = jnp.mean(jnp.stack(kl_terms))

    readout = readout_mean(x)
    return readout, kld_loss


# ----------------------------------------------------------------------------
# Deterministic parameter init (synthetic, no checkpoint)
# ----------------------------------------------------------------------------
def init_layer_params(key, d_model, d_ff):
    ks = jax.random.split(key, 6)

    def w(k, shape):
        return (0.02 * jax.random.normal(k, shape)).astype(jnp.float32)

    z = lambda n: jnp.zeros((1, n), jnp.float32)
    o = lambda n: jnp.ones((1, n), jnp.float32)
    return dict(
        wq=w(ks[0], (d_model, d_model)), bq=z(d_model),
        wk=w(ks[1], (d_model, d_model)), bk=z(d_model),
        wv=w(ks[2], (d_model, d_model)), bv=z(d_model),
        wo=w(ks[3], (d_model, d_model)), bo=z(d_model),
        g1=o(d_model), be1=z(d_model),
        w1=w(ks[4], (d_model, d_ff)), b1=z(d_ff),
        w2=w(ks[5], (d_ff, d_model)), b2=z(d_model),
        g2=o(d_model), be2=z(d_model),
    )


if __name__ == "__main__":
    B, T, D, L = 2, 8, 32, 2
    d_ff = 4 * D

    key = jax.random.PRNGKey(0)
    k_x, k_prior, *k_layers = jax.random.split(key, 2 + L)

    seq_emds = jax.random.normal(k_x, (B, T, D), jnp.float32)

    # pad mask: last 2 positions of batch element 1 are padding
    pad = jnp.ones((B, T), jnp.float32).at[1, T - 2:].set(0.0)
    pad_masks = pad.reshape(B, 1, T)

    # causal mask (lower triangular, 1 = allowed)
    causal_masks = jnp.tril(jnp.ones((T, T), jnp.float32))

    # priors: row-stochastic attention prior
    priors = jax.nn.softmax(jax.random.normal(k_prior, (B, T, T), jnp.float32),
                            axis=-1)

    layer_params = [init_layer_params(k_layers[i], D, d_ff) for i in range(L)]

    readout, kld_loss = gct_forward(seq_emds, pad_masks, causal_masks, priors,
                                    layer_params)
    jax.block_until_ready((readout, kld_loss))

    assert readout.shape == (B, D)
    assert kld_loss.shape == ()
    assert bool(jnp.all(jnp.isfinite(readout))) and bool(jnp.isfinite(kld_loss))
    print("KERNEL_OK")
</pallas_src>

<mosaic_0001>
module attributes {stable_mosaic.version = 11 : i64} {
  func.func @gct_prior_layer_kernel(%arg0: i32, %arg1: memref<1x8x32xf32, #tpu.memory_space<vmem>>, %arg2: memref<1x8x8xf32, #tpu.memory_space<vmem>>, %arg3: memref<32x32xbf16, #tpu.memory_space<vmem>>, %arg4: memref<1x32xf32, #tpu.memory_space<vmem>>, %arg5: memref<32x32xbf16, #tpu.memory_space<vmem>>, %arg6: memref<1x32xf32, #tpu.memory_space<vmem>>, %arg7: memref<1x32xf32, #tpu.memory_space<vmem>>, %arg8: memref<1x32xf32, #tpu.memory_space<vmem>>, %arg9: memref<32x128xbf16, #tpu.memory_space<vmem>>, %arg10: memref<1x128xf32, #tpu.memory_space<vmem>>, %arg11: memref<128x32xbf16, #tpu.memory_space<vmem>>, %arg12: memref<1x32xf32, #tpu.memory_space<vmem>>, %arg13: memref<1x32xf32, #tpu.memory_space<vmem>>, %arg14: memref<1x32xf32, #tpu.memory_space<vmem>>, %arg15: memref<1x8x32xf32, #tpu.memory_space<vmem>>) attributes {dimension_semantics = [#tpu.dimension_semantics<parallel>], iteration_bounds = array<i64: 2>, scalar_prefetch = 0 : i64, scratch_operands = 0 : i64, tpu.core_type = #tpu.core_type<tc>, window_params = [{transform_indices = @transform_0, window_bounds = array<i64: 1, 8, 32>}, {transform_indices = @transform_1, window_bounds = array<i64: 1, 8, 8>}, {pipeline_mode = #tpu.pipeline_mode<synchronous>, transform_indices = @transform_2, window_bounds = array<i64: 32, 32>}, {pipeline_mode = #tpu.pipeline_mode<synchronous>, transform_indices = @transform_3, window_bounds = array<i64: 1, 32>}, {pipeline_mode = #tpu.pipeline_mode<synchronous>, transform_indices = @transform_4, window_bounds = array<i64: 32, 32>}, {pipeline_mode = #tpu.pipeline_mode<synchronous>, transform_indices = @transform_5, window_bounds = array<i64: 1, 32>}, {pipeline_mode = #tpu.pipeline_mode<synchronous>, transform_indices = @transform_6, window_bounds = array<i64: 1, 32>}, {pipeline_mode = #tpu.pipeline_mode<synchronous>, transform_indices = @transform_7, window_bounds = array<i64: 1, 32>}, {pipeline_mode = #tpu.pipeline_mode<synchronous>, transform_indices = @transform_8, window_bounds = array<i64: 32, 128>}, {pipeline_mode = #tpu.pipeline_mode<synchronous>, transform_indices = @transform_9, window_bounds = array<i64: 1, 128>}, {pipeline_mode = #tpu.pipeline_mode<synchronous>, transform_indices = @transform_10, window_bounds = array<i64: 128, 32>}, {pipeline_mode = #tpu.pipeline_mode<synchronous>, transform_indices = @transform_11, window_bounds = array<i64: 1, 32>}, {pipeline_mode = #tpu.pipeline_mode<synchronous>, transform_indices = @transform_12, window_bounds = array<i64: 1, 32>}, {pipeline_mode = #tpu.pipeline_mode<synchronous>, transform_indices = @transform_13, window_bounds = array<i64: 1, 32>}, {transform_indices = @transform_14, window_bounds = array<i64: 1, 8, 32>}]} {
    %c0 = arith.constant 0 : index
    %c0_0 = arith.constant 0 : index
    %c0_1 = arith.constant 0 : index
    %0 = vector.load %arg1[%c0, %c0_0, %c0_1] : memref<1x8x32xf32, #tpu.memory_space<vmem>>, vector<1x8x32xf32>
    %1 = vector.shape_cast %0 : vector<1x8x32xf32> to vector<8x32xf32>
    %c0_2 = arith.constant 0 : index
    %c0_3 = arith.constant 0 : index
    %c0_4 = arith.constant 0 : index
    %2 = vector.load %arg2[%c0_2, %c0_3, %c0_4] : memref<1x8x8xf32, #tpu.memory_space<vmem>>, vector<1x8x8xf32>
    %3 = vector.shape_cast %2 : vector<1x8x8xf32> to vector<8x8xf32>
    %4 = arith.truncf %1 : vector<8x32xf32> to vector<8x32xbf16>
    %c0_5 = arith.constant 0 : index
    %c0_6 = arith.constant 0 : index
    %5 = vector.load %arg3[%c0_5, %c0_6] : memref<32x32xbf16, #tpu.memory_space<vmem>>, vector<32x32xbf16>
    %cst = arith.constant dense<0.000000e+00> : vector<8x32xf32>
    %6 = tpu.matmul %4, %5, %cst {dimension_numbers = #tpu.dot_dimension_numbers<[1], [0], [0], [1], [0, 0, 1, 1], [], []>} : vector<8x32xbf16>, vector<32x32xbf16>, vector<8x32xf32> -> vector<8x32xf32>
    %c0_7 = arith.constant 0 : index
    %c0_8 = arith.constant 0 : index
    %7 = vector.load %arg4[%c0_7, %c0_8] : memref<1x32xf32, #tpu.memory_space<vmem>>, vector<1x32xf32>
    %8 = vector.broadcast %7 : vector<1x32xf32> to vector<8x32xf32>
    %9 = arith.addf %6, %8 : vector<8x32xf32>
    %10 = arith.truncf %3 : vector<8x8xf32> to vector<8x8xbf16>
    %11 = arith.truncf %9 : vector<8x32xf32> to vector<8x32xbf16>
    %cst_9 = arith.constant dense<0.000000e+00> : vector<8x32xf32>
    %12 = tpu.matmul %10, %11, %cst_9 {dimension_numbers = #tpu.dot_dimension_numbers<[1], [0], [0], [1], [0, 0, 1, 1], [], []>} : vector<8x8xbf16>, vector<8x32xbf16>, vector<8x32xf32> -> vector<8x32xf32>
    %13 = arith.truncf %12 : vector<8x32xf32> to vector<8x32xbf16>
    %c0_10 = arith.constant 0 : index
    %c0_11 = arith.constant 0 : index
    %14 = vector.load %arg5[%c0_10, %c0_11] : memref<32x32xbf16, #tpu.memory_space<vmem>>, vector<32x32xbf16>
    %cst_12 = arith.constant dense<0.000000e+00> : vector<8x32xf32>
    %15 = tpu.matmul %13, %14, %cst_12 {dimension_numbers = #tpu.dot_dimension_numbers<[1], [0], [0], [1], [0, 0, 1, 1], [], []>} : vector<8x32xbf16>, vector<32x32xbf16>, vector<8x32xf32> -> vector<8x32xf32>
    %c0_13 = arith.constant 0 : index
    %c0_14 = arith.constant 0 : index
    %16 = vector.load %arg6[%c0_13, %c0_14] : memref<1x32xf32, #tpu.memory_space<vmem>>, vector<1x32xf32>
    %17 = vector.broadcast %16 : vector<1x32xf32> to vector<8x32xf32>
    %18 = arith.addf %15, %17 : vector<8x32xf32>
    %19 = arith.addf %1, %18 : vector<8x32xf32>
    %c0_15 = arith.constant 0 : index
    %c0_16 = arith.constant 0 : index
    %20 = vector.load %arg7[%c0_15, %c0_16] : memref<1x32xf32, #tpu.memory_space<vmem>>, vector<1x32xf32>
    %c0_17 = arith.constant 0 : index
    %c0_18 = arith.constant 0 : index
    %21 = vector.load %arg8[%c0_17, %c0_18] : memref<1x32xf32, #tpu.memory_space<vmem>>, vector<1x32xf32>
    %cst_19 = arith.constant dense<0.000000e+00> : vector<8xf32>
    %22 = vector.multi_reduction <add>, %19, %cst_19 [1] : vector<8x32xf32> to vector<8xf32>
    %23 = vector.shape_cast %22 : vector<8xf32> to vector<8x1xf32>
    %cst_20 = arith.constant 3.200000e+01 : f32
    %24 = vector.broadcast %cst_20 : f32 to vector<8x1xf32>
    %25 = arith.divf %23, %24 : vector<8x1xf32>
    %26 = vector.broadcast %25 : vector<8x1xf32> to vector<8x32xf32>
    %27 = arith.subf %19, %26 : vector<8x32xf32>
    %28 = arith.mulf %27, %27 : vector<8x32xf32>
    %cst_21 = arith.constant dense<0.000000e+00> : vector<8xf32>
    %29 = vector.multi_reduction <add>, %28, %cst_21 [1] : vector<8x32xf32> to vector<8xf32>
    %30 = vector.shape_cast %29 : vector<8xf32> to vector<8x1xf32>
    %cst_22 = arith.constant 3.200000e+01 : f32
    %31 = vector.broadcast %cst_22 : f32 to vector<8x1xf32>
    %32 = arith.divf %30, %31 : vector<8x1xf32>
    %33 = vector.broadcast %25 : vector<8x1xf32> to vector<8x32xf32>
    %34 = arith.subf %19, %33 : vector<8x32xf32>
    %cst_23 = arith.constant 9.99999974E-6 : f32
    %35 = vector.broadcast %cst_23 : f32 to vector<8x1xf32>
    %36 = arith.addf %32, %35 : vector<8x1xf32>
    %37 = math.rsqrt %36 : vector<8x1xf32>
    %38 = vector.broadcast %37 : vector<8x1xf32> to vector<8x32xf32>
    %39 = arith.mulf %34, %38 : vector<8x32xf32>
    %40 = vector.broadcast %20 : vector<1x32xf32> to vector<8x32xf32>
    %41 = arith.mulf %39, %40 : vector<8x32xf32>
    %42 = vector.broadcast %21 : vector<1x32xf32> to vector<8x32xf32>
    %43 = arith.addf %41, %42 : vector<8x32xf32>
    %44 = arith.truncf %43 : vector<8x32xf32> to vector<8x32xbf16>
    %c0_24 = arith.constant 0 : index
    %c0_25 = arith.constant 0 : index
    %45 = vector.load %arg9[%c0_24, %c0_25] : memref<32x128xbf16, #tpu.memory_space<vmem>>, vector<32x128xbf16>
    %cst_26 = arith.constant dense<0.000000e+00> : vector<8x128xf32>
    %46 = tpu.matmul %44, %45, %cst_26 {dimension_numbers = #tpu.dot_dimension_numbers<[1], [0], [0], [1], [0, 0, 1, 1], [], []>} : vector<8x32xbf16>, vector<32x128xbf16>, vector<8x128xf32> -> vector<8x128xf32>
    %c0_27 = arith.constant 0 : index
    %c0_28 = arith.constant 0 : index
    %47 = vector.load %arg10[%c0_27, %c0_28] : memref<1x128xf32, #tpu.memory_space<vmem>>, vector<1x128xf32>
    %48 = vector.broadcast %47 : vector<1x128xf32> to vector<8x128xf32>
    %49 = arith.addf %46, %48 : vector<8x128xf32>
    %cst_29 = arith.constant 0.000000e+00 : f32
    %50 = vector.broadcast %cst_29 : f32 to vector<8x128xf32>
    %51 = arith.maximumf %49, %50 : vector<8x128xf32>
    %52 = arith.truncf %51 : vector<8x128xf32> to vector<8x128xbf16>
    %c0_30 = arith.constant 0 : index
    %c0_31 = arith.constant 0 : index
    %53 = vector.load %arg11[%c0_30, %c0_31] : memref<128x32xbf16, #tpu.memory_space<vmem>>, vector<128x32xbf16>
    %cst_32 = arith.constant dense<0.000000e+00> : vector<8x32xf32>
    %54 = tpu.matmul %52, %53, %cst_32 {dimension_numbers = #tpu.dot_dimension_numbers<[1], [0], [0], [1], [0, 0, 1, 1], [], []>} : vector<8x128xbf16>, vector<128x32xbf16>, vector<8x32xf32> -> vector<8x32xf32>
    %c0_33 = arith.constant 0 : index
    %c0_34 = arith.constant 0 : index
    %55 = vector.load %arg12[%c0_33, %c0_34] : memref<1x32xf32, #tpu.memory_space<vmem>>, vector<1x32xf32>
    %56 = vector.broadcast %55 : vector<1x32xf32> to vector<8x32xf32>
    %57 = arith.addf %54, %56 : vector<8x32xf32>
    %58 = arith.addf %43, %57 : vector<8x32xf32>
    %c0_35 = arith.constant 0 : index
    %c0_36 = arith.constant 0 : index
    %59 = vector.load %arg13[%c0_35, %c0_36] : memref<1x32xf32, #tpu.memory_space<vmem>>, vector<1x32xf32>
    %c0_37 = arith.constant 0 : index
    %c0_38 = arith.constant 0 : index
    %60 = vector.load %arg14[%c0_37, %c0_38] : memref<1x32xf32, #tpu.memory_space<vmem>>, vector<1x32xf32>
    %cst_39 = arith.constant dense<0.000000e+00> : vector<8xf32>
    %61 = vector.multi_reduction <add>, %58, %cst_39 [1] : vector<8x32xf32> to vector<8xf32>
    %62 = vector.shape_cast %61 : vector<8xf32> to vector<8x1xf32>
    %cst_40 = arith.constant 3.200000e+01 : f32
    %63 = vector.broadcast %cst_40 : f32 to vector<8x1xf32>
    %64 = arith.divf %62, %63 : vector<8x1xf32>
    %65 = vector.broadcast %64 : vector<8x1xf32> to vector<8x32xf32>
    %66 = arith.subf %58, %65 : vector<8x32xf32>
    %67 = arith.mulf %66, %66 : vector<8x32xf32>
    %cst_41 = arith.constant dense<0.000000e+00> : vector<8xf32>
    %68 = vector.multi_reduction <add>, %67, %cst_41 [1] : vector<8x32xf32> to vector<8xf32>
    %69 = vector.shape_cast %68 : vector<8xf32> to vector<8x1xf32>
    %cst_42 = arith.constant 3.200000e+01 : f32
    %70 = vector.broadcast %cst_42 : f32 to vector<8x1xf32>
    %71 = arith.divf %69, %70 : vector<8x1xf32>
    %72 = vector.broadcast %64 : vector<8x1xf32> to vector<8x32xf32>
    %73 = arith.subf %58, %72 : vector<8x32xf32>
    %cst_43 = arith.constant 9.99999974E-6 : f32
    %74 = vector.broadcast %cst_43 : f32 to vector<8x1xf32>
    %75 = arith.addf %71, %74 : vector<8x1xf32>
    %76 = math.rsqrt %75 : vector<8x1xf32>
    %77 = vector.broadcast %76 : vector<8x1xf32> to vector<8x32xf32>
    %78 = arith.mulf %73, %77 : vector<8x32xf32>
    %79 = vector.broadcast %59 : vector<1x32xf32> to vector<8x32xf32>
    %80 = arith.mulf %78, %79 : vector<8x32xf32>
    %81 = vector.broadcast %60 : vector<1x32xf32> to vector<8x32xf32>
    %82 = arith.addf %80, %81 : vector<8x32xf32>
    %c0_44 = arith.constant 0 : index
    %c0_45 = arith.constant 0 : index
    %c0_46 = arith.constant 0 : index
    %83 = vector.load %arg15[%c0_44, %c0_45, %c0_46] : memref<1x8x32xf32, #tpu.memory_space<vmem>>, vector<1x8x32xf32>
    %84 = vector.shape_cast %83 : vector<1x8x32xf32> to vector<8x32xf32>
    %85 = vector.shape_cast %82 : vector<8x32xf32> to vector<1x8x32xf32>
    tpu.vector_store %arg15[%c0_44, %c0_45, %c0_46], %85 {strides = array<i32>} : memref<1x8x32xf32, #tpu.memory_space<vmem>>, vector<1x8x32xf32>,
    return
  }
  func.func @transform_0(%arg0: i32) -> (i32, i32, i32) {
    %c0_i32 = arith.constant 0 : i32
    %c0_i32_0 = arith.constant 0 : i32
    %c0_i32_1 = arith.constant 0 : i32
    return %arg0, %c0_i32, %c0_i32_0 : i32, i32, i32
  }
  func.func @transform_1(%arg0: i32) -> (i32, i32, i32) {
    %c0_i32 = arith.constant 0 : i32
    %c0_i32_0 = arith.constant 0 : i32
    %c0_i32_1 = arith.constant 0 : i32
    return %arg0, %c0_i32, %c0_i32_0 : i32, i32, i32
  }
  func.func @transform_2(%arg0: i32) -> (i32, i32) {
    %c0_i32 = arith.constant 0 : i32
    %c0_i32_0 = arith.constant 0 : i32
    %c0_i32_1 = arith.constant 0 : i32
    return %c0_i32, %c0_i32_0 : i32, i32
  }
  func.func @transform_3(%arg0: i32) -> (i32, i32) {
    %c0_i32 = arith.constant 0 : i32
    %c0_i32_0 = arith.constant 0 : i32
    %c0_i32_1 = arith.constant 0 : i32
    return %c0_i32, %c0_i32_0 : i32, i32
  }
  func.func @transform_4(%arg0: i32) -> (i32, i32) {
    %c0_i32 = arith.constant 0 : i32
    %c0_i32_0 = arith.constant 0 : i32
    %c0_i32_1 = arith.constant 0 : i32
    return %c0_i32, %c0_i32_0 : i32, i32
  }
  func.func @transform_5(%arg0: i32) -> (i32, i32) {
    %c0_i32 = arith.constant 0 : i32
    %c0_i32_0 = arith.constant 0 : i32
    %c0_i32_1 = arith.constant 0 : i32
    return %c0_i32, %c0_i32_0 : i32, i32
  }
  func.func @transform_6(%arg0: i32) -> (i32, i32) {
    %c0_i32 = arith.constant 0 : i32
    %c0_i32_0 = arith.constant 0 : i32
    %c0_i32_1 = arith.constant 0 : i32
    return %c0_i32, %c0_i32_0 : i32, i32
  }
  func.func @transform_7(%arg0: i32) -> (i32, i32) {
    %c0_i32 = arith.constant 0 : i32
    %c0_i32_0 = arith.constant 0 : i32
    %c0_i32_1 = arith.constant 0 : i32
    return %c0_i32, %c0_i32_0 : i32, i32
  }
  func.func @transform_8(%arg0: i32) -> (i32, i32) {
    %c0_i32 = arith.constant 0 : i32
    %c0_i32_0 = arith.constant 0 : i32
    %c0_i32_1 = arith.constant 0 : i32
    return %c0_i32, %c0_i32_0 : i32, i32
  }
  func.func @transform_9(%arg0: i32) -> (i32, i32) {
    %c0_i32 = arith.constant 0 : i32
    %c0_i32_0 = arith.constant 0 : i32
    %c0_i32_1 = arith.constant 0 : i32
    return %c0_i32, %c0_i32_0 : i32, i32
  }
  func.func @transform_10(%arg0: i32) -> (i32, i32) {
    %c0_i32 = arith.constant 0 : i32
    %c0_i32_0 = arith.constant 0 : i32
    %c0_i32_1 = arith.constant 0 : i32
    return %c0_i32, %c0_i32_0 : i32, i32
  }
  func.func @transform_11(%arg0: i32) -> (i32, i32) {
    %c0_i32 = arith.constant 0 : i32
    %c0_i32_0 = arith.constant 0 : i32
    %c0_i32_1 = arith.constant 0 : i32
    return %c0_i32, %c0_i32_0 : i32, i32
  }
  func.func @transform_12(%arg0: i32) -> (i32, i32) {
    %c0_i32 = arith.constant 0 : i32
    %c0_i32_0 = arith.constant 0 : i32
    %c0_i32_1 = arith.constant 0 : i32
    return %c0_i32, %c0_i32_0 : i32, i32
  }
  func.func @transform_13(%arg0: i32) -> (i32, i32) {
    %c0_i32 = arith.constant 0 : i32
    %c0_i32_0 = arith.constant 0 : i32
    %c0_i32_1 = arith.constant 0 : i32
    return %c0_i32, %c0_i32_0 : i32, i32
  }
  func.func @transform_14(%arg0: i32) -> (i32, i32, i32) {
    %c0_i32 = arith.constant 0 : i32
    %c0_i32_0 = arith.constant 0 : i32
    %c0_i32_1 = arith.constant 0 : i32
    return %arg0, %c0_i32, %c0_i32_0 : i32, i32, i32
  }
}

</mosaic_0001>

<llo_original>
// kernel: tpu_custom_call.1
$region0: #{tpu_custom_call.1}
  #allocation0 [shape = 'u32[]', space=smem, size = 0x4, offset = 0x4, fixed_abs, tag = 'smem constant byte address 0x4 - core index']
  #allocation1 [shape = 'u32[144,128]{1,0:T(1,128)}', space=vmem, size = 0x12000, scoped, tag = 'internal scratch']
  %s0 = inlined_call_operand.vmem [shape: f32[2,8,32], index: 0, kind: input, shape index: {}]
  %s1 = inlined_call_operand.vmem [shape: f32[2,8,8], index: 1, kind: input, shape index: {}]
  %s2 = inlined_call_operand.vmem [shape: bf16[32,32], index: 2, kind: input, shape index: {}]
  %s3 = inlined_call_operand.vmem [shape: f32[1,32], index: 3, kind: input, shape index: {}]
  %s4 = inlined_call_operand.vmem [shape: bf16[32,32], index: 4, kind: input, shape index: {}]
  %s5 = inlined_call_operand.vmem [shape: f32[1,32], index: 5, kind: input, shape index: {}]
  %s6 = inlined_call_operand.hbm [shape: f32[1,32], index: 6, kind: input, shape index: {}]
  %s7 = inlined_call_operand.hbm [shape: f32[1,32], index: 7, kind: input, shape index: {}]
  %s8 = inlined_call_operand.vmem [shape: bf16[32,128], index: 8, kind: input, shape index: {}]
  %s9 = inlined_call_operand.hbm [shape: f32[1,128], index: 9, kind: input, shape index: {}]
  %s10 = inlined_call_operand.vmem [shape: bf16[128,32], index: 10, kind: input, shape index: {}]
  %s11 = inlined_call_operand.vmem [shape: f32[1,32], index: 11, kind: input, shape index: {}]
  %s12 = inlined_call_operand.vmem [shape: f32[1,32], index: 12, kind: input, shape index: {}]
  %s13 = inlined_call_operand.vmem [shape: f32[1,32], index: 13, kind: input, shape index: {}]
  %s14 = inlined_call_operand.hbm [shape: f32[2,8,32], index: 14, kind: output, shape index: {}]
  %s15 = sld [smem:[#allocation0]]
  $region101: #{tpu_custom_call.1} parent=0
    _
  %s17 = ssub.s32 1, %s15
  %s18 = scalar_select 0, %s17, %s15
  $region1: #{tpu_custom_call.1} parent=0
    #allocation2 [shape = 'u8[512]{0}', space=vmem, size = 0x400, scoped, tag = 'input window, operand 6, single buffered']
    #allocation3 [shape = 's32[2]{0}', space=sflag, size = 0x8, scoped, tag = 'scoped memory for tpu_custom_call.1']
    #allocation4 [shape = 's32[2]{0}', space=sflag, size = 0x8, scoped, tag = 'scoped memory for tpu_custom_call.1']
    #allocation5 [shape = 'u8[512]{0}', space=vmem, size = 0x400, scoped, tag = 'input window, operand 7, single buffered']
    #allocation6 [shape = 's32[1]{0}', space=sflag, size = 0x4, scoped, tag = 'scoped memory for tpu_custom_call.1']
    #allocation7 [shape = 'u8[512]{0}', space=vmem, size = 0x400, scoped, tag = 'input window, operand 9, single buffered']
    #allocation8 [shape = 'u8[8192]{0}', space=vmem, size = 0x2000, scoped, tag = 'output window, operand 0']
    %19 = vsyncpa [#allocation3], 0
    %20 = vsyncpa [#allocation6], 0
    %21 = vsyncpa [#allocation4], 0
    %s22 = scalar_lea.sflag [#allocation4], 1
    %23 = vsyncpa %s22, 0
    loop: start=0, step=1, limit=4
    $region2: #{tpu_custom_call.1} parent=1 // loop_pre_header
      _
    $region3: #{tpu_custom_call.1} parent=1 // loop_header
      %s25 = sphi 0, %s29
      %p26 = scmp.ge.s32.totalorder %s25, 4
      %s35 = sphi 0, %s37
      %s38 = sphi 0, %s35
      %s39 = sphi 0, %s38
      %s55 = sphi 0, %s39
      %s61 = sphi 0, %s63
      %s64 = sphi 0, %s61
      %s65 = sphi 0, %s64
      %s81 = sphi 0, %s65
      %s85 = sphi 0, %s85
      %s87 = sphi 0, %s85
      %s88 = sphi 0, %s87
      %s102 = sphi 0, %s88
      %s106 = sphi 0, %s106
      %s108 = sphi 0, %s106
      %s109 = sphi 0, %s108
      %s123 = sphi 0, %s109
      %s127 = sphi 0, %s127
      %s129 = sphi 0, %s127
      %s130 = sphi 0, %s129
      %s144 = sphi 0, %s130
      %s148 = sphi 0, %s148
      %s150 = sphi 0, %s148
      %s151 = sphi 0, %s150
      %s165 = sphi 0, %s151
      %s169 = sphi 0, %s169
      %s171 = sphi 0, %s169
      %s172 = sphi 0, %s171
      %s186 = sphi 0, %s172
      %s190 = sphi 0, %s190
      %s192 = sphi 0, %s190
      %s193 = sphi 0, %s192
      %s207 = sphi 0, %s193
      %s211 = sphi 0, %s211
      %s213 = sphi 0, %s211
      %s214 = sphi 0, %s213
      %s228 = sphi 0, %s214
      %s232 = sphi 0, %s232
      %s234 = sphi 0, %s232
      %s235 = sphi 0, %s234
      %s249 = sphi 0, %s235
      %s253 = sphi 0, %s253
      %s255 = sphi 0, %s253
      %s256 = sphi 0, %s255
      %s270 = sphi 0, %s256
      %s274 = sphi 0, %s274
      %s276 = sphi 0, %s274
      %s277 = sphi 0, %s276
      %s291 = sphi 0, %s277
      %s295 = sphi 0, %s295
      %s297 = sphi 0, %s295
      %s298 = sphi 0, %s297
      %s312 = sphi 0, %s298
      %s316 = sphi 0, %s316
      %s318 = sphi 0, %s316
      %s319 = sphi 0, %s318
      %s333 = sphi 0, %s319
      %s339 = sphi 0, %s341
      %s342 = sphi 0, %s339
      %s343 = sphi 0, %s342
      %s359 = sphi 0, %s343
    $region4: #{tpu_custom_call.1} parent=1 // loop_header_branch
      %28 = sbr.rel (%p26) target = $region8
    $region5: #{tpu_custom_call.1} parent=1 // loop_body
      %s30 = ssub.s32 %s25, 1
      %s31 = ssub.s32 %s25, 2
      %s32 = sadd.s32 %s25, 1
      %s33 = ssub.s32 %s25, %s32
      %p34 = scmp.eq.s32.totalorder %s33, 0
      %s36 = sadd.s32 %s35, 1
      %s37 = scalar_select %p34, %s35, %s36
      %p40 = pneg %p34
      %p41 = scmp.eq.s32.totalorder %s25, 1
      %p42 = por %p40, %p41
      %p43 = scmp.ne.s32.totalorder %s35, %s38
      %p44 = scmp.eq.s32.totalorder %s25, 0
      %p45 = por %p43, %p44
      %p46 = scmp.ne.s32.totalorder %s35, %s38
      %p47 = scmp.eq.s32.totalorder %s30, 1
      %p48 = por %p46, %p47
      %p49 = scmp.ne.s32.totalorder %s38, %s39
      %p50 = scmp.eq.s32.totalorder %s30, 0
      %p51 = por %p49, %p50
      %p52 = scmp.ne.s32.totalorder %s38, %s39
      %p53 = scmp.eq.s32.totalorder %s31, 1
      %p54 = por %p52, %p53
      %p56 = scmp.ne.s32.totalorder %s39, %s55
      %p57 = scmp.eq.s32.totalorder %s31, 0
      %p58 = por %p56, %p57
      %s59 = ssub.s32 %s25, %s32
      %p60 = scmp.eq.s32.totalorder %s59, 0
      %s62 = sadd.s32 %s61, 1
      %s63 = scalar_select %p60, %s61, %s62
      %p66 = pneg %p60
      %p67 = scmp.eq.s32.totalorder %s25, 1
      %p68 = por %p66, %p67
      %p69 = scmp.ne.s32.totalorder %s61, %s64
      %p70 = scmp.eq.s32.totalorder %s25, 0
      %p71 = por %p69, %p70
      %p72 = scmp.ne.s32.totalorder %s61, %s64
      %p73 = scmp.eq.s32.totalorder %s30, 1
      %p74 = por %p72, %p73
      %p75 = scmp.ne.s32.totalorder %s64, %s65
      %p76 = scmp.eq.s32.totalorder %s30, 0
      %p77 = por %p75, %p76
      %p78 = scmp.ne.s32.totalorder %s64, %s65
      %p79 = scmp.eq.s32.totalorder %s31, 1
      %p80 = por %p78, %p79
      %p82 = scmp.ne.s32.totalorder %s65, %s81
      %p83 = scmp.eq.s32.totalorder %s31, 0
      %p84 = por %p82, %p83
      %s86 = sadd.s32 %s85, 1
      %p89 = scmp.eq.s32.totalorder %s25, 1
      %p90 = scmp.ne.s32.totalorder %s85, %s87
      %p91 = scmp.eq.s32.totalorder %s25, 0
      %p92 = por %p90, %p91
      %p93 = scmp.ne.s32.totalorder %s85, %s87
      %p94 = scmp.eq.s32.totalorder %s30, 1
      %p95 = por %p93, %p94
      %p96 = scmp.ne.s32.totalorder %s87, %s88
      %p97 = scmp.eq.s32.totalorder %s30, 0
      %p98 = por %p96, %p97
      %p99 = scmp.ne.s32.totalorder %s87, %s88
      %p100 = scmp.eq.s32.totalorder %s31, 1
      %p101 = por %p99, %p100
      %p103 = scmp.ne.s32.totalorder %s88, %s102
      %p104 = scmp.eq.s32.totalorder %s31, 0
      %p105 = por %p103, %p104
      %s107 = sadd.s32 %s106, 1
      %p110 = scmp.eq.s32.totalorder %s25, 1
      %p111 = scmp.ne.s32.totalorder %s106, %s108
      %p112 = scmp.eq.s32.totalorder %s25, 0
      %p113 = por %p111, %p112
      %p114 = scmp.ne.s32.totalorder %s106, %s108
      %p115 = scmp.eq.s32.totalorder %s30, 1
      %p116 = por %p114, %p115
      %p117 = scmp.ne.s32.totalorder %s108, %s109
      %p118 = scmp.eq.s32.totalorder %s30, 0
      %p119 = por %p117, %p118
      %p120 = scmp.ne.s32.totalorder %s108, %s109
      %p121 = scmp.eq.s32.totalorder %s31, 1
      %p122 = por %p120, %p121
      %p124 = scmp.ne.s32.totalorder %s109, %s123
      %p125 = scmp.eq.s32.totalorder %s31, 0
      %p126 = por %p124, %p125
      %s128 = sadd.s32 %s127, 1
      %p131 = scmp.eq.s32.totalorder %s25, 1
      %p132 = scmp.ne.s32.totalorder %s127, %s129
      %p133 = scmp.eq.s32.totalorder %s25, 0
      %p134 = por %p132, %p133
      %p135 = scmp.ne.s32.totalorder %s127, %s129
      %p136 = scmp.eq.s32.totalorder %s30, 1
      %p137 = por %p135, %p136
      %p138 = scmp.ne.s32.totalorder %s129, %s130
      %p139 = scmp.eq.s32.totalorder %s30, 0
      %p140 = por %p138, %p139
      %p141 = scmp.ne.s32.totalorder %s129, %s130
      %p142 = scmp.eq.s32.totalorder %s31, 1
      %p143 = por %p141, %p142
      %p145 = scmp.ne.s32.totalorder %s130, %s144
      %p146 = scmp.eq.s32.totalorder %s31, 0
      %p147 = por %p145, %p146
      %s149 = sadd.s32 %s148, 1
      %p152 = scmp.eq.s32.totalorder %s25, 1
      %p153 = scmp.ne.s32.totalorder %s148, %s150
      %p154 = scmp.eq.s32.totalorder %s25, 0
      %p155 = por %p153, %p154
      %p156 = scmp.ne.s32.totalorder %s148, %s150
      %p157 = scmp.eq.s32.totalorder %s30, 1
      %p158 = por %p156, %p157
      %p159 = scmp.ne.s32.totalorder %s150, %s151
      %p160 = scmp.eq.s32.totalorder %s30, 0
      %p161 = por %p159, %p160
      %p162 = scmp.ne.s32.totalorder %s150, %s151
      %p163 = scmp.eq.s32.totalorder %s31, 1
      %p164 = por %p162, %p163
      %p166 = scmp.ne.s32.totalorder %s151, %s165
      %p167 = scmp.eq.s32.totalorder %s31, 0
      %p168 = por %p166, %p167
      %s170 = sadd.s32 %s169, 1
      %p173 = scmp.eq.s32.totalorder %s25, 1
      %p174 = scmp.ne.s32.totalorder %s169, %s171
      %p175 = scmp.eq.s32.totalorder %s25, 0
      %p176 = por %p174, %p175
      %p177 = scmp.ne.s32.totalorder %s169, %s171
      %p178 = scmp.eq.s32.totalorder %s30, 1
      %p179 = por %p177, %p178
      %p180 = scmp.ne.s32.totalorder %s171, %s172
      %p181 = scmp.eq.s32.totalorder %s30, 0
      %p182 = por %p180, %p181
      %p183 = scmp.ne.s32.totalorder %s171, %s172
      %p184 = scmp.eq.s32.totalorder %s31, 1
      %p185 = por %p183, %p184
      %p187 = scmp.ne.s32.totalorder %s172, %s186
      %p188 = scmp.eq.s32.totalorder %s31, 0
      %p189 = por %p187, %p188
      %s191 = sadd.s32 %s190, 1
      %p194 = scmp.eq.s32.totalorder %s25, 1
      %p195 = scmp.ne.s32.totalorder %s190, %s192
      %p196 = scmp.eq.s32.totalorder %s25, 0
      %p197 = por %p195, %p196
      %p198 = scmp.ne.s32.totalorder %s190, %s192
      %p199 = scmp.eq.s32.totalorder %s30, 1
      %p200 = por %p198, %p199
      %p201 = scmp.ne.s32.totalorder %s192, %s193
      %p202 = scmp.eq.s32.totalorder %s30, 0
      %p203 = por %p201, %p202
      %p204 = scmp.ne.s32.totalorder %s192, %s193
      %p205 = scmp.eq.s32.totalorder %s31, 1
      %p206 = por %p204, %p205
      %p208 = scmp.ne.s32.totalorder %s193, %s207
      %p209 = scmp.eq.s32.totalorder %s31, 0
      %p210 = por %p208, %p209
      %s212 = sadd.s32 %s211, 1
      %p215 = scmp.eq.s32.totalorder %s25, 1
      %p216 = scmp.ne.s32.totalorder %s211, %s213
      %p217 = scmp.eq.s32.totalorder %s25, 0
      %p218 = por %p216, %p217
      %p219 = scmp.ne.s32.totalorder %s211, %s213
      %p220 = scmp.eq.s32.totalorder %s30, 1
      %p221 = por %p219, %p220
      %p222 = scmp.ne.s32.totalorder %s213, %s214
      %p223 = scmp.eq.s32.totalorder %s30, 0
      %p224 = por %p222, %p223
      %p225 = scmp.ne.s32.totalorder %s213, %s214
      %p226 = scmp.eq.s32.totalorder %s31, 1
      %p227 = por %p225, %p226
      %p229 = scmp.ne.s32.totalorder %s214, %s228
      %p230 = scmp.eq.s32.totalorder %s31, 0
      %p231 = por %p229, %p230
      %s233 = sadd.s32 %s232, 1
      %p236 = scmp.eq.s32.totalorder %s25, 1
      %p237 = scmp.ne.s32.totalorder %s232, %s234
      %p238 = scmp.eq.s32.totalorder %s25, 0
      %p239 = por %p237, %p238
      %p240 = scmp.ne.s32.totalorder %s232, %s234
      %p241 = scmp.eq.s32.totalorder %s30, 1
      %p242 = por %p240, %p241
      %p243 = scmp.ne.s32.totalorder %s234, %s235
      %p244 = scmp.eq.s32.totalorder %s30, 0
      %p245 = por %p243, %p244
      %p246 = scmp.ne.s32.totalorder %s234, %s235
      %p247 = scmp.eq.s32.totalorder %s31, 1
      %p248 = por %p246, %p247
      %p250 = scmp.ne.s32.totalorder %s235, %s249
      %p251 = scmp.eq.s32.totalorder %s31, 0
      %p252 = por %p250, %p251
      %s254 = sadd.s32 %s253, 1
      %p257 = scmp.eq.s32.totalorder %s25, 1
      %p258 = scmp.ne.s32.totalorder %s253, %s255
      %p259 = scmp.eq.s32.totalorder %s25, 0
      %p260 = por %p258, %p259
      %p261 = scmp.ne.s32.totalorder %s253, %s255
      %p262 = scmp.eq.s32.totalorder %s30, 1
      %p263 = por %p261, %p262
      %p264 = scmp.ne.s32.totalorder %s255, %s256
      %p265 = scmp.eq.s32.totalorder %s30, 0
      %p266 = por %p264, %p265
      %p267 = scmp.ne.s32.totalorder %s255, %s256
      %p268 = scmp.eq.s32.totalorder %s31, 1
      %p269 = por %p267, %p268
      %p271 = scmp.ne.s32.totalorder %s256, %s270
      %p272 = scmp.eq.s32.totalorder %s31, 0
      %p273 = por %p271, %p272
      %s275 = sadd.s32 %s274, 1
      %p278 = scmp.eq.s32.totalorder %s25, 1
      %p279 = scmp.ne.s32.totalorder %s274, %s276
      %p280 = scmp.eq.s32.totalorder %s25, 0
      %p281 = por %p279, %p280
      %p282 = scmp.ne.s32.totalorder %s274, %s276
      %p283 = scmp.eq.s32.totalorder %s30, 1
      %p284 = por %p282, %p283
      %p285 = scmp.ne.s32.totalorder %s276, %s277
      %p286 = scmp.eq.s32.totalorder %s30, 0
      %p287 = por %p285, %p286
      %p288 = scmp.ne.s32.totalorder %s276, %s277
      %p289 = scmp.eq.s32.totalorder %s31, 1
      %p290 = por %p288, %p289
      %p292 = scmp.ne.s32.totalorder %s277, %s291
      %p293 = scmp.eq.s32.totalorder %s31, 0
      %p294 = por %p292, %p293
      %s296 = sadd.s32 %s295, 1
      %p299 = scmp.eq.s32.totalorder %s25, 1
      %p300 = scmp.ne.s32.totalorder %s295, %s297
      %p301 = scmp.eq.s32.totalorder %s25, 0
      %p302 = por %p300, %p301
      %p303 = scmp.ne.s32.totalorder %s295, %s297
      %p304 = scmp.eq.s32.totalorder %s30, 1
      %p305 = por %p303, %p304
      %p306 = scmp.ne.s32.totalorder %s297, %s298
      %p307 = scmp.eq.s32.totalorder %s30, 0
      %p308 = por %p306, %p307
      %p309 = scmp.ne.s32.totalorder %s297, %s298
      %p310 = scmp.eq.s32.totalorder %s31, 1
      %p311 = por %p309, %p310
      %p313 = scmp.ne.s32.totalorder %s298, %s312
      %p314 = scmp.eq.s32.totalorder %s31, 0
      %p315 = por %p313, %p314
      %s317 = sadd.s32 %s316, 1
      %p320 = scmp.eq.s32.totalorder %s25, 1
      %p321 = scmp.ne.s32.totalorder %s316, %s318
      %p322 = scmp.eq.s32.totalorder %s25, 0
      %p323 = por %p321, %p322
      %p324 = scmp.ne.s32.totalorder %s316, %s318
      %p325 = scmp.eq.s32.totalorder %s30, 1
      %p326 = por %p324, %p325
      %p327 = scmp.ne.s32.totalorder %s318, %s319
      %p328 = scmp.eq.s32.totalorder %s30, 0
      %p329 = por %p327, %p328
      %p330 = scmp.ne.s32.totalorder %s318, %s319
      %p331 = scmp.eq.s32.totalorder %s31, 1
      %p332 = por %p330, %p331
      %p334 = scmp.ne.s32.totalorder %s319, %s333
      %p335 = scmp.eq.s32.totalorder %s31, 0
      %p336 = por %p334, %p335
      %s337 = ssub.s32 %s25, %s32
      %p338 = scmp.eq.s32.totalorder %s337, 0
      %s340 = sadd.s32 %s339, 1
      %s341 = scalar_select %p338, %s339, %s340
      %p344 = pneg %p338
      %p345 = scmp.eq.s32.totalorder %s25, 1
      %p346 = por %p344, %p345
      %p347 = scmp.ne.s32.totalorder %s339, %s342
      %p348 = scmp.eq.s32.totalorder %s25, 0
      %p349 = por %p347, %p348
      %p350 = scmp.ne.s32.totalorder %s339, %s342
      %p351 = scmp.eq.s32.totalorder %s30, 1
      %p352 = por %p350, %p351
      %p353 = scmp.ne.s32.totalorder %s342, %s343
      %p354 = scmp.eq.s32.totalorder %s30, 0
      %p355 = por %p353, %p354
      %p356 = scmp.ne.s32.totalorder %s342, %s343
      %p357 = scmp.eq.s32.totalorder %s31, 1
      %p358 = por %p356, %p357
      %p360 = scmp.ne.s32.totalorder %s343, %s359
      %p361 = scmp.eq.s32.totalorder %s31, 0
      %p362 = por %p360, %p361
      %p363 = scmp.le.s32.totalorder 1, %s25
      %p364 = scmp.lt.s32.totalorder %s25, 3
      %p365 = pnand %p363, %p364
      %p366 = pneg %p365
      // Predicated region
      $region9: #{tpu_custom_call.1} parent=5 // pred_check
        _
      $region10: #{tpu_custom_call.1} parent=5 // pred_check_branch
        %368 = sbr.rel (%p365) target = $region12
      $region11: #{tpu_custom_call.1} parent=5 // pred_region
        %s369 = ssub.s32 %s25, 1
        // Predicated region
        $region13: #{tpu_custom_call.1} parent=11 // pred_check
          %p370 = pneg %p98
        $region14: #{tpu_custom_call.1} parent=11 // pred_check_branch
          %372 = sbr.rel (%p370) target = $region16
        $region15: #{tpu_custom_call.1} parent=11 // pred_region
          _
        $region16: #{tpu_custom_call.1} parent=11 // pred_fallthru
          _
        // Predicated region
        $region17: #{tpu_custom_call.1} parent=11 // pred_check
          %p373 = pneg %p119
        $region18: #{tpu_custom_call.1} parent=11 // pred_check_branch
          %375 = sbr.rel (%p373) target = $region20
        $region19: #{tpu_custom_call.1} parent=11 // pred_region
          _
        $region20: #{tpu_custom_call.1} parent=11 // pred_fallthru
          _
        // Predicated region
        $region21: #{tpu_custom_call.1} parent=11 // pred_check
          %p376 = pneg %p140
        $region22: #{tpu_custom_call.1} parent=11 // pred_check_branch
          %378 = sbr.rel (%p376) target = $region24
        $region23: #{tpu_custom_call.1} parent=11 // pred_region
          _
        $region24: #{tpu_custom_call.1} parent=11 // pred_fallthru
          _
        // Predicated region
        $region25: #{tpu_custom_call.1} parent=11 // pred_check
          %p379 = pneg %p161
        $region26: #{tpu_custom_call.1} parent=11 // pred_check_branch
          %381 = sbr.rel (%p379) target = $region28
        $region27: #{tpu_custom_call.1} parent=11 // pred_region
          _
        $region28: #{tpu_custom_call.1} parent=11 // pred_fallthru
          _
        // Predicated region
        $region29: #{tpu_custom_call.1} parent=11 // pred_check
          %p382 = pneg %p182
        $region30: #{tpu_custom_call.1} parent=11 // pred_check_branch
          %384 = sbr.rel (%p382) target = $region32
        $region31: #{tpu_custom_call.1} parent=11 // pred_region
          %s386 = ssub.s32 16, 16
          %387 = vsyncadd [#allocation3], %s386
          %s389 = sshll.u32 [#allocation2], 4
          %s390 = int_to_ptr.vmem [resolvable:$true] %s389
          %392 = dma.hbm_to_vmem [thread:$0]  %s6, 16, %s390, [#allocation3]
        $region32: #{tpu_custom_call.1} parent=11 // pred_fallthru
          _
        // Predicated region
        $region33: #{tpu_custom_call.1} parent=11 // pred_check
          %p393 = pneg %p203
        $region34: #{tpu_custom_call.1} parent=11 // pred_check_branch
          %395 = sbr.rel (%p393) target = $region36
        $region35: #{tpu_custom_call.1} parent=11 // pred_region
          %s397 = ssub.s32 16, 16
          %398 = vsyncadd [#allocation6], %s397
          %s400 = sshll.u32 [#allocation5], 4
          %s401 = int_to_ptr.vmem [resolvable:$true] %s400
          %403 = dma.hbm_to_vmem [thread:$0]  %s7, 16, %s401, [#allocation6]
        $region36: #{tpu_custom_call.1} parent=11 // pred_fallthru
          _
        // Predicated region
        $region37: #{tpu_custom_call.1} parent=11 // pred_check
          %p404 = pneg %p224
        $region38: #{tpu_custom_call.1} parent=11 // pred_check_branch
          %406 = sbr.rel (%p404) target = $region40
        $region39: #{tpu_custom_call.1} parent=11 // pred_region
          _
        $region40: #{tpu_custom_call.1} parent=11 // pred_fallthru
          _
        // Predicated region
        $region41: #{tpu_custom_call.1} parent=11 // pred_check
          %p407 = pneg %p245
        $region42: #{tpu_custom_call.1} parent=11 // pred_check_branch
          %409 = sbr.rel (%p407) target = $region44
        $region43: #{tpu_custom_call.1} parent=11 // pred_region
          %s411 = ssub.s32 16, 16
          %412 = vsyncadd [#allocation6], %s411
          %s414 = sshll.u32 [#allocation7], 4
          %s415 = int_to_ptr.vmem [resolvable:$true] %s414
          %417 = dma.hbm_to_vmem [thread:$0]  %s9, 16, %s415, [#allocation6]
        $region44: #{tpu_custom_call.1} parent=11 // pred_fallthru
          _
        // Predicated region
        $region45: #{tpu_custom_call.1} parent=11 // pred_check
          %p418 = pneg %p266
        $region46: #{tpu_custom_call.1} parent=11 // pred_check_branch
          %420 = sbr.rel (%p418) target = $region48
        $region47: #{tpu_custom_call.1} parent=11 // pred_region
          _
        $region48: #{tpu_custom_call.1} parent=11 // pred_fallthru
          _
        // Predicated region
        $region49: #{tpu_custom_call.1} parent=11 // pred_check
          %p421 = pneg %p287
        $region50: #{tpu_custom_call.1} parent=11 // pred_check_branch
          %423 = sbr.rel (%p421) target = $region52
        $region51: #{tpu_custom_call.1} parent=11 // pred_region
          _
        $region52: #{tpu_custom_call.1} parent=11 // pred_fallthru
          _
        // Predicated region
        $region53: #{tpu_custom_call.1} parent=11 // pred_check
          %p424 = pneg %p308
        $region54: #{tpu_custom_call.1} parent=11 // pred_check_branch
          %426 = sbr.rel (%p424) target = $region56
        $region55: #{tpu_custom_call.1} parent=11 // pred_region
          _
        $region56: #{tpu_custom_call.1} parent=11 // pred_fallthru
          _
        // Predicated region
        $region57: #{tpu_custom_call.1} parent=11 // pred_check
          %p427 = pneg %p329
        $region58: #{tpu_custom_call.1} parent=11 // pred_check_branch
          %429 = sbr.rel (%p427) target = $region60
        $region59: #{tpu_custom_call.1} parent=11 // pred_region
          _
        $region60: #{tpu_custom_call.1} parent=11 // pred_fallthru
          _
      $region12: #{tpu_custom_call.1} parent=5 // pred_fallthru
        _
      %p430 = scmp.lt.s32.totalorder %s25, 2
      // Predicated region
      $region61: #{tpu_custom_call.1} parent=5 // pred_check
        %p431 = pneg %p430
      $region62: #{tpu_custom_call.1} parent=5 // pred_check_branch
        %433 = sbr.rel (%p431) target = $region64
      $region63: #{tpu_custom_call.1} parent=5 // pred_region
        // Predicated region
        $region65: #{tpu_custom_call.1} parent=63 // pred_check
          %p434 = pneg %p45
        $region66: #{tpu_custom_call.1} parent=63 // pred_check_branch
          %436 = sbr.rel (%p434) target = $region68
        $region67: #{tpu_custom_call.1} parent=63 // pred_region
          %p437 = scmp.lt.s32.totalorder %s25, 1
          %s438 = scalar_select %p437, %s25, 1
          %s439 = smul.addr %s438, 8
          %s440 = scalar_lea.vmem %s0, %s439
        $region68: #{tpu_custom_call.1} parent=63 // pred_fallthru
          _
        // Predicated region
        $region69: #{tpu_custom_call.1} parent=63 // pred_check
          %p441 = pneg %p71
        $region70: #{tpu_custom_call.1} parent=63 // pred_check_branch
          %443 = sbr.rel (%p441) target = $region72
        $region71: #{tpu_custom_call.1} parent=63 // pred_region
          %p444 = scmp.lt.s32.totalorder %s25, 1
          %s445 = scalar_select %p444, %s25, 1
          %s446 = smul.addr %s445, 8
          %s447 = scalar_lea.vmem %s1, %s446
        $region72: #{tpu_custom_call.1} parent=63 // pred_fallthru
          _
      $region64: #{tpu_custom_call.1} parent=5 // pred_fallthru
        _
      %p448 = scmp.le.s32.totalorder 1, %s25
      %p449 = scmp.lt.s32.totalorder %s25, 3
      %p450 = pnand %p448, %p449
      %p451 = pneg %p450
      // Predicated region
      $region73: #{tpu_custom_call.1} parent=5 // pred_check
        _
      $region74: #{tpu_custom_call.1} parent=5 // pred_check_branch
        %453 = sbr.rel (%p450) target = $region76
      $region75: #{tpu_custom_call.1} parent=5 // pred_region
        %s454 = ssub.s32 %s25, 1
        // Predicated region
        $region77: #{tpu_custom_call.1} parent=75 // pred_check
          %p455 = pneg %p182
        $region78: #{tpu_custom_call.1} parent=75 // pred_check_branch
          %457 = sbr.rel (%p455) target = $region80
        $region79: #{tpu_custom_call.1} parent=75 // pred_region
          %458 = dma.done [#allocation3], 16
        $region80: #{tpu_custom_call.1} parent=75 // pred_fallthru
          _
        // Predicated region
        $region81: #{tpu_custom_call.1} parent=75 // pred_check
          %p459 = pneg %p203
        $region82: #{tpu_custom_call.1} parent=75 // pred_check_branch
          %461 = sbr.rel (%p459) target = $region84
        $region83: #{tpu_custom_call.1} parent=75 // pred_region
          %462 = dma.done [#allocation6], 16
        $region84: #{tpu_custom_call.1} parent=75 // pred_fallthru
          _
        // Predicated region
        $region85: #{tpu_custom_call.1} parent=75 // pred_check
          %p463 = pneg %p245
        $region86: #{tpu_custom_call.1} parent=75 // pred_check_branch
          %465 = sbr.rel (%p463) target = $region88
        $region87: #{tpu_custom_call.1} parent=75 // pred_region
          %466 = dma.done [#allocation6], 16
        $region88: #{tpu_custom_call.1} parent=75 // pred_fallthru
          _
        %p467 = scmp.lt.s32.totalorder %s30, 1
        %s468 = scalar_select %p467, %s30, 1
        %s469 = smul.addr %s468, 8
        %s470 = scalar_lea.vmem %s0, %s469
        %p471 = pneg %p51
        %p472 = pneg %p48
        %p473 = scmp.lt.s32.totalorder %s30, 1
        %s474 = scalar_select %p473, %s30, 1
        %s475 = smul.addr %s474, 8
        %s476 = scalar_lea.vmem %s1, %s475
        %p477 = pneg %p77
        %p478 = pneg %p74
        %p479 = pneg %p98
        %p480 = pneg %p95
        %p481 = pneg %p119
        %p482 = pneg %p116
        %p483 = pneg %p140
        %p484 = pneg %p137
        %p485 = pneg %p161
        %p486 = pneg %p158
        %p487 = pneg %p182
        %p488 = pneg %p179
        %p489 = pneg %p203
        %p490 = pneg %p200
        %p491 = pneg %p224
        %p492 = pneg %p221
        %p493 = pneg %p245
        %p494 = pneg %p242
        %p495 = pneg %p266
        %p496 = pneg %p263
        %p497 = pneg %p287
        %p498 = pneg %p284
        %p499 = pneg %p308
        %p500 = pneg %p305
        %p501 = pneg %p329
        %p502 = pneg %p326
        %p503 = pneg %p355
        %p504 = pneg %p352
        %s505 = sand.u32 %s342, 1
        %s506 = scalar_lea.sflag [#allocation4], %s505
        %s507 = sand.u32 %s342, 1
        %s508 = smul.addr %s507, 8
        %s509 = scalar_lea.vmem [#allocation8], %s508
        %p510 = scmp.lt.s32.totalorder %s30, 1
        %s511 = scalar_select %p510, %s30, 1
        %s512 = smul.addr %s511, 8
        %s513 = scalar_lea.vmem %s0, %s512
        %p514 = scmp.lt.s32.totalorder %s30, 1
        %s515 = scalar_select %p514, %s30, 1
        %s516 = smul.addr %s515, 8
        %s517 = scalar_lea.vmem %s1, %s516
        %v519 = vld [vmem:[%s513] sm:$0xff]
        %v520 = vld [vmem:[%s517] sm:$0xff]
        %v521 = vpack.c.bf16 %v519, %v519
        %v522 = vld [vmem:[%s2] sm:$0xf]
        %v523 = vld [vmem:[%s2 + $0x4] sm:$0xf]
        %v524 = vld [vmem:[%s2 + $0x8] sm:$0xf]
        %v525 = vld [vmem:[%s2 + $0xc] sm:$0xf]
        %v526 = vld [vmem:[%s3] sm:$0x1]
        %v528 = vlaneseq
        %v529 = vshrl.u32 %v528, 7
        %v530 = vsub.s32 0, %v529
        %v531 = vrot.slane %v526, %v530
        %v537 = vunpack.c.l.b16 %v522
        %v538 = vunpack.c.l.b16 %v523
        %v539 = vunpack.c.l.b16 %v524
        %v540 = vunpack.c.l.b16 %v525
        %v541 = vpack.c.b16 %v538, %v537
        %v542 = vpack.c.b16 %v540, %v539
        %vm545 = vcmask 261120
        %v547 = vsel %vm545, %v521, 0
        %549 = vmatprep.subr.bf16.mxu0 0
        %550 = vmatpush1.bf16.msra.mxu0 0
        %551 = vmatprep.subr.bf16.mxu0 0
        %552 = vmatpush1.bf16.msra.mxu0 0
        %553 = vmatprep.subr.bf16.mxu0 0
        %554 = vmatpush1.bf16.msra.mxu0 0
        %555 = vmatprep.subr.bf16.mxu0 0
        %556 = vmatpush1.bf16.msra.mxu0 0
        %557 = vmatprep.subr.bf16.mxu0 0
        %558 = vmatpush1.bf16.msra.mxu0 0
        %559 = vmatprep.subr.bf16.mxu0 0
        %560 = vmatpush1.bf16.msra.mxu0 0
        %561 = vmatprep.subr.bf16.mxu0 0
        %562 = vmatpush1.bf16.msra.mxu0 %v542
        %563 = vmatprep.subr.bf16.mxu0 0
        %564 = vmatpush1.bf16.msra.mxu0 %v541
        %565 = vmatprep.subr.bf16.mxu0 0
        %566 = vmatpush2.bf16.msra.mxu0 0
        %567 = vmatprep.subr.bf16.mxu0 0
        %568 = vmatpush2.bf16.msra.mxu0 0
        %569 = vmatprep.subr.bf16.mxu0 0
        %570 = vmatpush2.bf16.msra.mxu0 0
        %571 = vmatprep.subr.bf16.mxu0 0
        %572 = vmatpush2.bf16.msra.mxu0 0
        %573 = vmatprep.subr.bf16.mxu0 0
        %574 = vmatpush2.bf16.msra.mxu0 0
        %575 = vmatprep.subr.bf16.mxu0 0
        %576 = vmatpush2.bf16.msra.mxu0 0
        %577 = vmatprep.subr.bf16.mxu0 0
        %578 = vmatpush2.bf16.msra.mxu0 0
        %579 = vmatprep.subr.bf16.mxu0 0
        %580 = vmatpush2.bf16.msra.mxu0 0
        %581 = vmatprep.mubr.bf16.mxu0 0
        %582 = vmatmul.mubr.bf16.gmra.mxu0 %v547
        %v583 = vpop.f32.mrf.mxu0
        %v584 = vadd.f32 %v531, %v583
        %v585 = vpop.f32.mrf.mxu0
        %v586 = vpop.f32.mrf.mxu0
        %v587 = vpop.f32.mrf.mxu0
        %588 = vdwg.mxu0
        %v589 = vpack.c.bf16 %v520, %v520
        %v590 = vpack.c.bf16 %v584, %v584
        %vm591 = vcmask 64512
        %v593 = vsel %vm591, %v589, 0
        %vm595 = vcmask 1043456
        %v597 = vsel %vm595, %v590, 0
        %599 = vmatprep.subr.bf16.mxu0 0
        %600 = vmatpush1.bf16.msra.mxu0 0
        %601 = vmatprep.subr.bf16.mxu0 0
        %602 = vmatpush1.bf16.msra.mxu0 0
        %603 = vmatprep.subr.bf16.mxu0 0
        %604 = vmatpush1.bf16.msra.mxu0 0
        %605 = vmatprep.subr.bf16.mxu0 0
        %606 = vmatpush1.bf16.msra.mxu0 0
        %607 = vmatprep.subr.bf16.mxu0 0
        %608 = vmatpush1.bf16.msra.mxu0 0
        %609 = vmatprep.subr.bf16.mxu0 0
        %610 = vmatpush1.bf16.msra.mxu0 0
        %611 = vmatprep.subr.bf16.mxu0 0
        %612 = vmatpush1.bf16.msra.mxu0 0
        %613 = vmatprep.subr.bf16.mxu0 0
        %614 = vmatpush1.bf16.msra.mxu0 %v597
        %615 = vmatprep.subr.bf16.mxu0 0
        %616 = vmatpush2.bf16.msra.mxu0 0
        %617 = vmatprep.subr.bf16.mxu0 0
        %618 = vmatpush2.bf16.msra.mxu0 0
        %619 = vmatprep.subr.bf16.mxu0 0
        %620 = vmatpush2.bf16.msra.mxu0 0
        %621 = vmatprep.subr.bf16.mxu0 0
        %622 = vmatpush2.bf16.msra.mxu0 0
        %623 = vmatprep.subr.bf16.mxu0 0
        %624 = vmatpush2.bf16.msra.mxu0 0
        %625 = vmatprep.subr.bf16.mxu0 0
        %626 = vmatpush2.bf16.msra.mxu0 0
        %627 = vmatprep.subr.bf16.mxu0 0
        %628 = vmatpush2.bf16.msra.mxu0 0
        %629 = vmatprep.subr.bf16.mxu0 0
        %630 = vmatpush2.bf16.msra.mxu0 0
        %631 = vmatprep.mubr.bf16.mxu0 0
        %632 = vmatmul.mubr.bf16.gmra.mxu0 %v593
        %v633 = vpop.f32.mrf.mxu0
        %v634 = vadd.f32 0.0, %v633
        %v635 = vpop.f32.mrf.mxu0
        %v636 = vpop.f32.mrf.mxu0
        %v637 = vpop.f32.mrf.mxu0
        %638 = vdwg.mxu0
        %v639 = vpack.c.bf16 %v634, %v634
        %v640 = vld [vmem:[%s4] sm:$0xf]
        %v641 = vld [vmem:[%s4 + $0x4] sm:$0xf]
        %v642 = vld [vmem:[%s4 + $0x8] sm:$0xf]
        %v643 = vld [vmem:[%s4 + $0xc] sm:$0xf]
        %v644 = vld [vmem:[%s5] sm:$0x1]
        %v646 = vlaneseq
        %v647 = vshrl.u32 %v646, 7
        %v648 = vsub.s32 0, %v647
        %v649 = vrot.slane %v644, %v648
        %v655 = vunpack.c.l.b16 %v640
        %v656 = vunpack.c.l.b16 %v641
        %v657 = vunpack.c.l.b16 %v642
        %v658 = vunpack.c.l.b16 %v643
        %v659 = vpack.c.b16 %v656, %v655
        %v660 = vpack.c.b16 %v658, %v657
        %v664 = vsel %vm545, %v639, 0
        %666 = vmatprep.subr.bf16.mxu0 0
        %667 = vmatpush1.bf16.msra.mxu0 0
        %668 = vmatprep.subr.bf16.mxu0 0
        %669 = vmatpush1.bf16.msra.mxu0 0
        %670 = vmatprep.subr.bf16.mxu0 0
        %671 = vmatpush1.bf16.msra.mxu0 0
        %672 = vmatprep.subr.bf16.mxu0 0
        %673 = vmatpush1.bf16.msra.mxu0 0
        %674 = vmatprep.subr.bf16.mxu0 0
        %675 = vmatpush1.bf16.msra.mxu0 0
        %676 = vmatprep.subr.bf16.mxu0 0
        %677 = vmatpush1.bf16.msra.mxu0 0
        %678 = vmatprep.subr.bf16.mxu0 0
        %679 = vmatpush1.bf16.msra.mxu0 %v660
        %680 = vmatprep.subr.bf16.mxu0 0
        %681 = vmatpush1.bf16.msra.mxu0 %v659
        %682 = vmatprep.subr.bf16.mxu0 0
        %683 = vmatpush2.bf16.msra.mxu0 0
        %684 = vmatprep.subr.bf16.mxu0 0
        %685 = vmatpush2.bf16.msra.mxu0 0
        %686 = vmatprep.subr.bf16.mxu0 0
        %687 = vmatpush2.bf16.msra.mxu0 0
        %688 = vmatprep.subr.bf16.mxu0 0
        %689 = vmatpush2.bf16.msra.mxu0 0
        %690 = vmatprep.subr.bf16.mxu0 0
        %691 = vmatpush2.bf16.msra.mxu0 0
        %692 = vmatprep.subr.bf16.mxu0 0
        %693 = vmatpush2.bf16.msra.mxu0 0
        %694 = vmatprep.subr.bf16.mxu0 0
        %695 = vmatpush2.bf16.msra.mxu0 0
        %696 = vmatprep.subr.bf16.mxu0 0
        %697 = vmatpush2.bf16.msra.mxu0 0
        %698 = vmatprep.mubr.bf16.mxu0 0
        %699 = vmatmul.mubr.bf16.gmra.mxu0 %v664
        %v700 = vpop.f32.mrf.mxu0
        %v701 = vadd.f32 %v649, %v700
        %v702 = vpop.f32.mrf.mxu0
        %v703 = vpop.f32.mrf.mxu0
        %v704 = vpop.f32.mrf.mxu0
        %705 = vdwg.mxu0
        %v706 = vadd.f32 %v519, %v701
        %v707 = vld [vmem:[#allocation2] sm:$0x1]
        %v708 = vld [vmem:[#allocation5] sm:$0x1]
        %v709 = vsel %vm545, %v706, 0.0
        %710 = vadd.xlane.f32.xlu0 %v709
        %v711 = vpop.xlane.xlu0 %710
        %v712 = vrcp.pop 32.0
        %v713 = vmul.f32 %v711, %v712
        %v714 = vsub.f32 %v706, %v713
        %v715 = vmul.f32 %v714, %v714
        %v716 = vsel %vm545, %v715, 0.0
        %717 = vadd.xlane.f32.xlu0 %v716
        %v718 = vpop.xlane.xlu0 %717
        %v719 = vmul.f32 %v718, %v712
        %v720 = vadd.f32 %v719, 1e-05
        %v721 = vrsqrt.pop %v720
        %v722 = vmul.f32 %v714, %v721
        %v724 = vlaneseq
        %v725 = vshrl.u32 %v724, 7
        %v726 = vsub.s32 0, %v725
        %v727 = vrot.slane %v707, %v726
        %v729 = vmul.f32 %v722, %v727
        %v731 = vlaneseq
        %v732 = vshrl.u32 %v731, 7
        %v733 = vsub.s32 0, %v732
        %v734 = vrot.slane %v708, %v733
        %v736 = vadd.f32 %v729, %v734
        %v737 = vpack.c.bf16 %v736, %v736
        %v738 = vld [vmem:[%s8] sm:$0xf]
        %v739 = vld [vmem:[%s8 + $0x4] sm:$0xf]
        %v740 = vld [vmem:[%s8 + $0x8] sm:$0xf]
        %v741 = vld [vmem:[%s8 + $0xc] sm:$0xf]
        %v742 = vld [vmem:[#allocation7] sm:$0x1]
        %v744 = vlaneseq
        %v745 = vshrl.u32 %v744, 7
        %v746 = vsub.s32 0, %v745
        %v747 = vrot.slane %v742, %v746
        %v753 = vunpack.c.l.b16 %v738
        %v754 = vunpack.c.l.b16 %v739
        %v755 = vunpack.c.l.b16 %v740
        %v756 = vunpack.c.l.b16 %v741
        %v757 = vpack.c.b16 %v754, %v753
        %v758 = vpack.c.b16 %v756, %v755
        %v762 = vsel %vm545, %v737, 0
        %764 = vmatprep.subr.bf16.mxu0 0
        %765 = vmatpush1.bf16.msra.mxu0 0
        %766 = vmatprep.subr.bf16.mxu0 0
        %767 = vmatpush1.bf16.msra.mxu0 0
        %768 = vmatprep.subr.bf16.mxu0 0
        %769 = vmatpush1.bf16.msra.mxu0 0
        %770 = vmatprep.subr.bf16.mxu0 0
        %771 = vmatpush1.bf16.msra.mxu0 0
        %772 = vmatprep.subr.bf16.mxu0 0
        %773 = vmatpush1.bf16.msra.mxu0 0
        %774 = vmatprep.subr.bf16.mxu0 0
        %775 = vmatpush1.bf16.msra.mxu0 0
        %776 = vmatprep.subr.bf16.mxu0 0
        %777 = vmatpush1.bf16.msra.mxu0 %v758
        %778 = vmatprep.subr.bf16.mxu0 0
        %779 = vmatpush1.bf16.msra.mxu0 %v757
        %780 = vmatprep.subr.bf16.mxu0 0
        %781 = vmatpush2.bf16.msra.mxu0 0
        %782 = vmatprep.subr.bf16.mxu0 0
        %783 = vmatpush2.bf16.msra.mxu0 0
        %784 = vmatprep.subr.bf16.mxu0 0
        %785 = vmatpush2.bf16.msra.mxu0 0
        %786 = vmatprep.subr.bf16.mxu0 0
        %787 = vmatpush2.bf16.msra.mxu0 0
        %788 = vmatprep.subr.bf16.mxu0 0
        %789 = vmatpush2.bf16.msra.mxu0 0
        %790 = vmatprep.subr.bf16.mxu0 0
        %791 = vmatpush2.bf16.msra.mxu0 0
        %792 = vmatprep.subr.bf16.mxu0 0
        %793 = vmatpush2.bf16.msra.mxu0 0
        %794 = vmatprep.subr.bf16.mxu0 0
        %795 = vmatpush2.bf16.msra.mxu0 0
        %796 = vmatprep.mubr.bf16.mxu0 0
        %797 = vmatmul.mubr.bf16.gmra.mxu0 %v762
        %v798 = vpop.f32.mrf.mxu0
        %v799 = vadd.f32 %v747, %v798
        %v800 = vpop.f32.mrf.mxu0
        %v801 = vpop.f32.mrf.mxu0
        %v802 = vpop.f32.mrf.mxu0
        %803 = vdwg.mxu0
        %v804 = vmax.f32 %v799, 0.0
        %v805 = vpack.c.bf16 %v804, %v804
        %v806 = vld [vmem:[%s10] sm:$0xf]
        %v807 = vld [vmem:[%s10 + $0x4] sm:$0xf]
        %v808 = vld [vmem:[%s10 + $0x8] sm:$0xf]
        %v809 = vld [vmem:[%s10 + $0xc] sm:$0xf]
        %v810 = vld [vmem:[%s10 + $0x10] sm:$0xf]
        %v811 = vld [vmem:[%s10 + $0x14] sm:$0xf]
        %v812 = vld [vmem:[%s10 + $0x18] sm:$0xf]
        %v813 = vld [vmem:[%s10 + $0x1c] sm:$0xf]
        %v814 = vld [vmem:[%s10 + $0x20] sm:$0xf]
        %v815 = vld [vmem:[%s10 + $0x24] sm:$0xf]
        %v816 = vld [vmem:[%s10 + $0x28] sm:$0xf]
        %v817 = vld [vmem:[%s10 + $0x2c] sm:$0xf]
        %v818 = vld [vmem:[%s10 + $0x30] sm:$0xf]
        %v819 = vld [vmem:[%s10 + $0x34] sm:$0xf]
        %v820 = vld [vmem:[%s10 + $0x38] sm:$0xf]
        %v821 = vld [vmem:[%s10 + $0x3c] sm:$0xf]
        %v822 = vld [vmem:[%s11] sm:$0x1]
        %v824 = vlaneseq
        %v825 = vshrl.u32 %v824, 7
        %v826 = vsub.s32 0, %v825
        %v827 = vrot.slane %v822, %v826
        %v845 = vunpack.c.l.b16 %v806
        %v846 = vunpack.c.l.b16 %v807
        %v847 = vunpack.c.l.b16 %v808
        %v848 = vunpack.c.l.b16 %v809
        %v849 = vunpack.c.l.b16 %v810
        %v850 = vunpack.c.l.b16 %v811
        %v851 = vunpack.c.l.b16 %v812
        %v852 = vunpack.c.l.b16 %v813
        %v853 = vunpack.c.l.b16 %v814
        %v854 = vunpack.c.l.b16 %v815
        %v855 = vunpack.c.l.b16 %v816
        %v856 = vunpack.c.l.b16 %v817
        %v857 = vunpack.c.l.b16 %v818
        %v858 = vunpack.c.l.b16 %v819
        %v859 = vunpack.c.l.b16 %v820
        %v860 = vunpack.c.l.b16 %v821
        %v861 = vpack.c.b16 %v846, %v845
        %v862 = vpack.c.b16 %v848, %v847
        %v863 = vpack.c.b16 %v850, %v849
        %v864 = vpack.c.b16 %v852, %v851
        %v865 = vpack.c.b16 %v854, %v853
        %v866 = vpack.c.b16 %v856, %v855
        %v867 = vpack.c.b16 %v858, %v857
        %v868 = vpack.c.b16 %v860, %v859
        %877 = vmatprep.subr.bf16.mxu0 0
        %878 = vmatpush1.bf16.msra.mxu0 %v868
        %879 = vmatprep.subr.bf16.mxu0 0
        %880 = vmatpush1.bf16.msra.mxu0 %v867
        %881 = vmatprep.subr.bf16.mxu0 0
        %882 = vmatpush1.bf16.msra.mxu0 %v866
        %883 = vmatprep.subr.bf16.mxu0 0
        %884 = vmatpush1.bf16.msra.mxu0 %v865
        %885 = vmatprep.subr.bf16.mxu0 0
        %886 = vmatpush1.bf16.msra.mxu0 %v864
        %887 = vmatprep.subr.bf16.mxu0 0
        %888 = vmatpush1.bf16.msra.mxu0 %v863
        %889 = vmatprep.subr.bf16.mxu0 0
        %890 = vmatpush1.bf16.msra.mxu0 %v862
        %891 = vmatprep.subr.bf16.mxu0 0
        %892 = vmatpush1.bf16.msra.mxu0 %v861
        %893 = vmatprep.subr.bf16.mxu0 0
        %894 = vmatpush2.bf16.msra.mxu0 0
        %895 = vmatprep.subr.bf16.mxu0 0
        %896 = vmatpush2.bf16.msra.mxu0 0
        %897 = vmatprep.subr.bf16.mxu0 0
        %898 = vmatpush2.bf16.msra.mxu0 0
        %899 = vmatprep.subr.bf16.mxu0 0
        %900 = vmatpush2.bf16.msra.mxu0 0
        %901 = vmatprep.subr.bf16.mxu0 0
        %902 = vmatpush2.bf16.msra.mxu0 0
        %903 = vmatprep.subr.bf16.mxu0 0
        %904 = vmatpush2.bf16.msra.mxu0 0
        %905 = vmatprep.subr.bf16.mxu0 0
        %906 = vmatpush2.bf16.msra.mxu0 0
        %907 = vmatprep.subr.bf16.mxu0 0
        %908 = vmatpush2.bf16.msra.mxu0 0
        %909 = vmatprep.mubr.bf16.mxu0 0
        %910 = vmatmul.mubr.bf16.gmra.mxu0 %v805
        %v911 = vpop.f32.mrf.mxu0
        %v912 = vadd.f32 %v827, %v911
        %v913 = vpop.f32.mrf.mxu0
        %v914 = vpop.f32.mrf.mxu0
        %v915 = vpop.f32.mrf.mxu0
        %916 = vdwg.mxu0
        %v917 = vadd.f32 %v736, %v912
        %v918 = vld [vmem:[%s12] sm:$0x1]
        %v919 = vld [vmem:[%s13] sm:$0x1]
        %v920 = vsel %vm545, %v917, 0.0
        %921 = vadd.xlane.f32.xlu0 %v920
        %v922 = vpop.xlane.xlu0 %921
        %v923 = vmul.f32 %v922, %v712
        %v924 = vsub.f32 %v917, %v923
        %v925 = vmul.f32 %v924, %v924
        %v926 = vsel %vm545, %v925, 0.0
        %927 = vadd.xlane.f32.xlu0 %v926
        %v928 = vpop.xlane.xlu0 %927
        %v929 = vmul.f32 %v928, %v712
        %v930 = vadd.f32 %v929, 1e-05
        %v931 = vrsqrt.pop %v930
        %v932 = vmul.f32 %v924, %v931
        %v934 = vlaneseq
        %v935 = vshrl.u32 %v934, 7
        %v936 = vsub.s32 0, %v935
        %v937 = vrot.slane %v918, %v936
        %v939 = vmul.f32 %v932, %v937
        %v941 = vlaneseq
        %v942 = vshrl.u32 %v941, 7
        %v943 = vsub.s32 0, %v942
        %v944 = vrot.slane %v919, %v943
        %v946 = vadd.f32 %v939, %v944
        %947 = vst.msk [vmem:[%s509] sm:$0xff] %vm545, %v946
        %s948 = sand.u32 %s342, 1
        %s949 = scalar_lea.sflag [#allocation4], %s948
        %s950 = sand.u32 %s342, 1
        %s951 = smul.addr %s950, 8
        %s952 = scalar_lea.vmem [#allocation8], %s951
        // Predicated region
        $region89: #{tpu_custom_call.1} parent=75 // pred_check
          %p953 = pneg %p352
        $region90: #{tpu_custom_call.1} parent=75 // pred_check_branch
          %955 = sbr.rel (%p953) target = $region92
        $region91: #{tpu_custom_call.1} parent=75 // pred_region
          %s957 = ssub.s32 128, 128
          %958 = vsyncadd %s949, %s957
          %s959 = smul.addr %s30, 128
          %s960 = scalar_lea.hbm %s14, %s959
          %s962 = sshll.u32 %s952, 4
          %s963 = int_to_ptr.vmem [resolvable:$true] %s962
          %965 = dma.vmem_to_hbm [thread:$0]  %s963, 128, %s960, %s949
        $region92: #{tpu_custom_call.1} parent=75 // pred_fallthru
          _
      $region76: #{tpu_custom_call.1} parent=5 // pred_fallthru
        _
      %p966 = scmp.le.s32.totalorder 2, %s25
      // Predicated region
      $region93: #{tpu_custom_call.1} parent=5 // pred_check
        %p967 = pneg %p966
      $region94: #{tpu_custom_call.1} parent=5 // pred_check_branch
        %969 = sbr.rel (%p967) target = $region96
      $region95: #{tpu_custom_call.1} parent=5 // pred_region
        %s970 = ssub.s32 %s25, 2
        // Predicated region
        $region97: #{tpu_custom_call.1} parent=95 // pred_check
          %p971 = pneg %p358
        $region98: #{tpu_custom_call.1} parent=95 // pred_check_branch
          %973 = sbr.rel (%p971) target = $region100
        $region99: #{tpu_custom_call.1} parent=95 // pred_region
          %s974 = sand.u32 %s343, 1
          %s975 = scalar_lea.sflag [#allocation4], %s974
          %s976 = sand.u32 %s343, 1
          %s977 = smul.addr %s976, 8
          %s978 = scalar_lea.vmem [#allocation8], %s977
          %979 = dma.done %s975, 128
        $region100: #{tpu_custom_call.1} parent=95 // pred_fallthru
          _
      $region96: #{tpu_custom_call.1} parent=5 // pred_fallthru
        _
    $region6: #{tpu_custom_call.1} parent=1 // loop_footer
      %s29 = sadd.s32 1, %s25
    $region7: #{tpu_custom_call.1} parent=1 // loop_footer_branch
      %24 = sbr.rel target = $region3
    $region8: #{tpu_custom_call.1} parent=1 // loop_exit
      _
    %980 = vsyncpa [#allocation3], 1
    %s981 = scalar_lea.sflag [#allocation3], 1
    %982 = vsyncpa %s981, 1
    %983 = vsyncpa [#allocation6], 1
    %984 = vsyncpa [#allocation4], 1
    %s985 = scalar_lea.sflag [#allocation4], 1
    %986 = vsyncpa %s985, 1

</llo_original>
